<compile_context>
chip_gen: v7x
topology: tpu7x:2x2x1
jax: 0.10.0
libtpu: 0.0.40
codegen_flags: <defaults>
</compile_context>

<pallas_src>
import math
from functools import partial

import jax
import jax.numpy as jnp
from jax.experimental import pallas as pl
from jax.experimental.pallas import tpu as pltpu

_NEG_CE = -1e30  # CE sentinel on masked lanes (defensive; never enters top-k)


def _dc_topk_kernel(logits_ref, tgt_ref, ce_ref, tp_ref, sp_ref, cnt_ref, *,
                    s_total):
    """Per (batch, pixel-tile) grid step.

    logits_ref: (1, C, TN) logits (native dtype)   tgt_ref: (1, 1, TN) i32 labels
    ce_ref:     (1, 1, TN) f32 per-pixel cross entropy
    tp_ref/sp_ref/cnt_ref: (1, C, 1) f32 per-class accumulators for the current
        batch element, resident across the pixel ("arbitrary") grid axis.
    s_total: static number of valid pixels per batch element (closed over).
    """
    # Zero the per-class accumulators at the start of each batch element's sweep.
    @pl.when(pl.program_id(1) == 0)
    def _():
        tp_ref[...] = jnp.zeros_like(tp_ref)
        sp_ref[...] = jnp.zeros_like(sp_ref)
        cnt_ref[...] = jnp.zeros_like(cnt_ref)

    tile = logits_ref.shape[2]
    x = logits_ref[...].astype(jnp.float32)                 # (1, C, TN)
    tgt = tgt_ref[...]                                      # (1, 1, TN) i32

    # Ragged-tail mask: lanes past the spatial extent hold undefined data.
    lane = jax.lax.broadcasted_iota(jnp.int32, (1, 1, tile), 2)
    valid = (pl.program_id(1) * tile + lane) < s_total      # (1, 1, TN) bool
    valid_f = valid.astype(jnp.float32)

    # Zero invalid lanes BEFORE exp so tail garbage can't produce inf/NaN.
    x = jnp.where(valid, x, 0.0)

    # Numerically-stable softmax over the channel (sublane) axis.
    m = jnp.max(x, axis=1, keepdims=True)                   # (1, 1, TN)
    e = jnp.exp(x - m)
    s = jnp.sum(e, axis=1, keepdims=True)                   # (1, 1, TN)
    inv_s = pl.reciprocal(s, approx=True)                   # EUP vrcp (free slot)
    inv_s = inv_s * (2.0 - s * inv_s)                       # one Newton step -> ~f32
    lse = m + jnp.log(s)                                    # logsumexp

    # One-hot of the target class (garbage tail targets are masked out below).
    cls = jax.lax.broadcasted_iota(jnp.int32, x.shape, 1)   # (1, C, TN)
    onehot = (cls == tgt).astype(jnp.float32)

    # Per-pixel cross entropy: -log softmax at the target class.
    x_t = jnp.sum(x * onehot, axis=1, keepdims=True)        # (1, 1, TN)
    ce_ref[...] = jnp.where(valid, lse - x_t, _NEG_CE)

    # Masked softmax probs (exactly zero on invalid lanes) -> dice statistics.
    # fp = sum_p - tp and fn = cnt - tp are derived in the host-side finalize.
    p = e * (inv_s * valid_f)                                # (1, C, TN)
    tp_ref[...] += jnp.sum(p * onehot, axis=2, keepdims=True)
    sp_ref[...] += jnp.sum(p, axis=2, keepdims=True)
    cnt_ref[...] += jnp.sum(onehot * valid_f, axis=2, keepdims=True)


def dc_and_topk_loss(net_output, target, *, weight_ce=1.0, weight_dice=1.0,
                     smooth=1e-5, do_bg=False, k=10.0, tile_n=None):
    """DC_and_topk_loss.forward (ignore_label=None, batch_dice=True)."""
    B, C = net_output.shape[0], net_output.shape[1]
    S = math.prod(net_output.shape[2:])
    N = B * S

    # Tile selection: keep a (C, tile) f32 slab around 1 MiB so intermediates
    # (+ double-buffered input blocks) stay well under VMEM on all gens
    # (incl. v7x's 64 MiB), while still moving >= ~0.5 MB per grid step.
    if tile_n is None:
        tile_n = (1 << 20) // (4 * C)
        tile_n = max(2048, min(32768, tile_n))
    tile_n = max(128, (tile_n // 128) * 128)
    lane_s = ((S + 127) // 128) * 128          # S rounded up to lane multiple
    tile = min(tile_n, lane_s)
    num_tiles = -(-S // tile)

    # Free (contiguous) reshapes -- no transpose, no padding, no f32 copy.
    logits = net_output.reshape(B, C, S)
    if logits.dtype not in (jnp.float32, jnp.bfloat16):
        logits = logits.astype(jnp.float32)
    tgt = target.reshape(B, 1, S).astype(jnp.int32)

    blk_bytes = C * tile * jnp.dtype(logits.dtype).itemsize
    vmem_limit = int(min(64 * 1024 * 1024, max(32 * 1024 * 1024, 24 * blk_bytes)))

    grid = (B, num_tiles)
    kernel = partial(_dc_topk_kernel, s_total=S)
    # TODO(synk): on v7x with B == 1, add a leading "parallel" split of the
    # spatial axis so both TensorCores get work (per-half accumulators summed
    # in the finalize); skipped here to keep one code path for v5e/v6e.
    ce_pp, tp_b, sp_b, cnt_b = pl.pallas_call(
        kernel,
        out_shape=(
            jax.ShapeDtypeStruct((B, 1, S), jnp.float32),   # per-pixel CE
            jax.ShapeDtypeStruct((B, C, 1), jnp.float32),   # tp per (batch, class)
            jax.ShapeDtypeStruct((B, C, 1), jnp.float32),   # sum of probs
            jax.ShapeDtypeStruct((B, C, 1), jnp.float32),   # target counts
        ),
        grid_spec=pltpu.PrefetchScalarGridSpec(
            num_scalar_prefetch=0,
            grid=grid,
            in_specs=[
                pl.BlockSpec((1, C, tile), lambda b, i: (b, 0, i)),
                pl.BlockSpec((1, 1, tile), lambda b, i: (b, 0, i)),
            ],
            out_specs=[
                pl.BlockSpec((1, 1, tile), lambda b, i: (b, 0, i)),
                pl.BlockSpec((1, C, 1), lambda b, i: (b, 0, 0)),
                pl.BlockSpec((1, C, 1), lambda b, i: (b, 0, 0)),
                pl.BlockSpec((1, C, 1), lambda b, i: (b, 0, 0)),
            ],
        ),
        compiler_params=pltpu.CompilerParams(
            # batch axis parallel (megacore), pixel axis carries accumulators
            dimension_semantics=("parallel", "arbitrary"),
            vmem_limit_bytes=vmem_limit),
    )(logits, tgt)

    # ---- Soft dice finalize (batch_dice=True: sum partials over batch).
    tp = jnp.sum(tp_b, axis=0)[:, 0]                     # (C,)
    sum_p = jnp.sum(sp_b, axis=0)[:, 0]
    cnt = jnp.sum(cnt_b, axis=0)[:, 0]
    fp = sum_p - tp
    fn = cnt - tp
    nominator = 2.0 * tp + smooth
    denominator = jnp.clip(2.0 * tp + fp + fn + smooth, 1e-8, None)
    dc = nominator / denominator
    if not do_bg:
        dc = dc[1:]                                      # drop background class
    dc_loss = -jnp.mean(dc)

    # ---- TopK cross-entropy finalize
    # TODO(synk): for very large N (3-D nnUNet volumes) replace the exact
    # lax.top_k (near-full sort) with a streaming histogram / bisection
    # threshold pass; exact top_k kept here to match PyTorch TopKLoss
    # tie-handling bit-for-bit.
    n_topk = max(1, int(N * k / 100))
    topk_vals, _ = jax.lax.top_k(ce_pp.reshape(-1), n_topk)
    ce_loss = jnp.mean(topk_vals)

    return weight_ce * ce_loss + weight_dice * dc_loss


def _reference(net_output, target, *, weight_ce=1.0, weight_dice=1.0,
               smooth=1e-5, k=10.0):
    """Pure-JAX reference mirroring the PyTorch module (ignore_label=None)."""
    C = net_output.shape[1]
    p = jax.nn.softmax(net_output.astype(jnp.float32), axis=1)
    onehot = jax.nn.one_hot(target[:, 0], C, axis=1, dtype=jnp.float32)
    axes = (0,) + tuple(range(2, net_output.ndim))     # batch_dice=True
    tp = jnp.sum(p * onehot, axis=axes)
    fp = jnp.sum(p * (1.0 - onehot), axis=axes)
    fn = jnp.sum((1.0 - p) * onehot, axis=axes)
    dc = (2.0 * tp + smooth) / jnp.clip(2.0 * tp + fp + fn + smooth, 1e-8, None)
    dc_loss = -jnp.mean(dc[1:])                        # do_bg=False
    logp = jax.nn.log_softmax(net_output.astype(jnp.float32), axis=1)
    ce_pp = -jnp.take_along_axis(logp, target.astype(jnp.int32), axis=1)[:, 0]
    n = ce_pp.size
    ce_loss = jnp.mean(jax.lax.top_k(ce_pp.reshape(-1), max(1, int(n * k / 100)))[0])
    return weight_ce * ce_loss + weight_dice * dc_loss


if __name__ == "__main__":
    key = jax.random.PRNGKey(0)
    k1, k2 = jax.random.split(key)
    B, C, H, W = 2, 4, 16, 16
    net_output = jax.random.normal(k1, (B, C, H, W), dtype=jnp.float32)
    target = jax.random.randint(k2, (B, 1, H, W), 0, C, dtype=jnp.int32)

    loss = dc_and_topk_loss(net_output, target)
    loss = jax.block_until_ready(loss)

    ref = jax.block_until_ready(_reference(net_output, target))
    assert abs(float(loss) - float(ref)) < 1e-4, (float(loss), float(ref))

    print("KERNEL_OK")
</pallas_src>

<mosaic_0001>
module attributes {stable_mosaic.version = 11 : i64} {
  func.func @_dc_topk_kernel(%arg0: i32, %arg1: i32, %arg2: memref<1x4x256xf32, #tpu.memory_space<vmem>>, %arg3: memref<1x1x256xi32, #tpu.memory_space<vmem>>, %arg4: memref<1x1x256xf32, #tpu.memory_space<vmem>>, %arg5: memref<1x4x1xf32, #tpu.memory_space<vmem>>, %arg6: memref<1x4x1xf32, #tpu.memory_space<vmem>>, %arg7: memref<1x4x1xf32, #tpu.memory_space<vmem>>) attributes {dimension_semantics = [#tpu.dimension_semantics<parallel>, #tpu.dimension_semantics<arbitrary>], iteration_bounds = array<i64: 2, 1>, scalar_prefetch = 0 : i64, scratch_operands = 0 : i64, tpu.core_type = #tpu.core_type<tc>, window_params = [{transform_indices = @transform_0, window_bounds = array<i64: 1, 4, 256>}, {transform_indices = @transform_1, window_bounds = array<i64: 1, 1, 256>}, {transform_indices = @transform_2, window_bounds = array<i64: 1, 1, 256>}, {transform_indices = @transform_3, window_bounds = array<i64: 1, 4, 1>}, {transform_indices = @transform_4, window_bounds = array<i64: 1, 4, 1>}, {transform_indices = @transform_5, window_bounds = array<i64: 1, 4, 1>}]} {
    %c0_i32 = arith.constant 0 : i32
    %0 = arith.cmpi eq, %arg1, %c0_i32 : i32
    %1 = arith.extui %0 : i1 to i32
    %c0_i32_0 = arith.constant 0 : i32
    %2 = arith.cmpi ne, %1, %c0_i32_0 : i32
    scf.if %2 {
      %cst_36 = arith.constant 0.000000e+00 : f32
      %64 = vector.broadcast %cst_36 : f32 to vector<1x4x1xf32>
      %c0_37 = arith.constant 0 : index
      %c0_38 = arith.constant 0 : index
      %c0_39 = arith.constant 0 : index
      %65 = vector.load %arg5[%c0_37, %c0_38, %c0_39] : memref<1x4x1xf32, #tpu.memory_space<vmem>>, vector<1x4x1xf32>
      tpu.vector_store %arg5[%c0_37, %c0_38, %c0_39], %64 {strides = array<i32>} : memref<1x4x1xf32, #tpu.memory_space<vmem>>, vector<1x4x1xf32>,
      %cst_40 = arith.constant 0.000000e+00 : f32
      %66 = vector.broadcast %cst_40 : f32 to vector<1x4x1xf32>
      %c0_41 = arith.constant 0 : index
      %c0_42 = arith.constant 0 : index
      %c0_43 = arith.constant 0 : index
      %67 = vector.load %arg6[%c0_41, %c0_42, %c0_43] : memref<1x4x1xf32, #tpu.memory_space<vmem>>, vector<1x4x1xf32>
      tpu.vector_store %arg6[%c0_41, %c0_42, %c0_43], %66 {strides = array<i32>} : memref<1x4x1xf32, #tpu.memory_space<vmem>>, vector<1x4x1xf32>,
      %cst_44 = arith.constant 0.000000e+00 : f32
      %68 = vector.broadcast %cst_44 : f32 to vector<1x4x1xf32>
      %c0_45 = arith.constant 0 : index
      %c0_46 = arith.constant 0 : index
      %c0_47 = arith.constant 0 : index
      %69 = vector.load %arg7[%c0_45, %c0_46, %c0_47] : memref<1x4x1xf32, #tpu.memory_space<vmem>>, vector<1x4x1xf32>
      tpu.vector_store %arg7[%c0_45, %c0_46, %c0_47], %68 {strides = array<i32>} : memref<1x4x1xf32, #tpu.memory_space<vmem>>, vector<1x4x1xf32>,
    } else {
    }
    %c0 = arith.constant 0 : index
    %c0_1 = arith.constant 0 : index
    %c0_2 = arith.constant 0 : index
    %3 = vector.load %arg2[%c0, %c0_1, %c0_2] : memref<1x4x256xf32, #tpu.memory_space<vmem>>, vector<1x4x256xf32>
    %c0_3 = arith.constant 0 : index
    %c0_4 = arith.constant 0 : index
    %c0_5 = arith.constant 0 : index
    %4 = vector.load %arg3[%c0_3, %c0_4, %c0_5] : memref<1x1x256xi32, #tpu.memory_space<vmem>>, vector<1x1x256xi32>
    %5 = tpu.iota {dimensions = array<i32: 2>} : vector<1x1x256xi32>
    %c256_i32 = arith.constant 256 : i32
    %6 = arith.muli %arg1, %c256_i32 : i32
    %7 = vector.broadcast %6 : i32 to vector<1x1x256xi32>
    %8 = arith.addi %7, %5 : vector<1x1x256xi32>
    %c256_i32_6 = arith.constant 256 : i32
    %9 = vector.broadcast %c256_i32_6 : i32 to vector<1x1x256xi32>
    %10 = arith.cmpi slt, %8, %9 : vector<1x1x256xi32>
    %11 = arith.extui %10 : vector<1x1x256xi1> to vector<1x1x256xi32>
    %12 = arith.sitofp %11 : vector<1x1x256xi32> to vector<1x1x256xf32>
    %cst = arith.constant 0.000000e+00 : f32
    %13 = vector.shape_cast %10 : vector<1x1x256xi1> to vector<1x1x256xi1>
    %14 = vector.broadcast %13 : vector<1x1x256xi1> to vector<1x4x256xi1>
    %15 = vector.broadcast %cst : f32 to vector<1x4x256xf32>
    %16 = arith.select %14, %3, %15 : vector<1x4x256xi1>, vector<1x4x256xf32>
    %cst_7 = arith.constant dense<0xFF800000> : vector<1x256xf32>
    %17 = vector.multi_reduction <maximumf>, %16, %cst_7 [1] : vector<1x4x256xf32> to vector<1x256xf32>
    %18 = vector.shape_cast %17 : vector<1x256xf32> to vector<1x1x256xf32>
    %19 = vector.broadcast %18 : vector<1x1x256xf32> to vector<1x4x256xf32>
    %20 = arith.subf %16, %19 : vector<1x4x256xf32>
    %21 = math.exp %20 : vector<1x4x256xf32>
    %cst_8 = arith.constant dense<0.000000e+00> : vector<1x256xf32>
    %22 = vector.multi_reduction <add>, %21, %cst_8 [1] : vector<1x4x256xf32> to vector<1x256xf32>
    %23 = vector.shape_cast %22 : vector<1x256xf32> to vector<1x1x256xf32>
    %24 = tpu.reciprocal %23 {approx = true} : vector<1x1x256xf32> -> vector<1x1x256xf32>
    %25 = arith.mulf %23, %24 : vector<1x1x256xf32>
    %cst_9 = arith.constant 2.000000e+00 : f32
    %26 = vector.broadcast %cst_9 : f32 to vector<1x1x256xf32>
    %27 = arith.subf %26, %25 : vector<1x1x256xf32>
    %28 = arith.mulf %24, %27 : vector<1x1x256xf32>
    %29 = math.log %23 : vector<1x1x256xf32>
    %30 = arith.addf %18, %29 : vector<1x1x256xf32>
    %31 = tpu.iota {dimensions = array<i32: 1>} : vector<1x4x256xi32>
    %32 = vector.broadcast %4 : vector<1x1x256xi32> to vector<1x4x256xi32>
    %33 = arith.cmpi eq, %31, %32 : vector<1x4x256xi32>
    %34 = arith.extui %33 : vector<1x4x256xi1> to vector<1x4x256xi32>
    %35 = arith.sitofp %34 : vector<1x4x256xi32> to vector<1x4x256xf32>
    %36 = arith.mulf %16, %35 : vector<1x4x256xf32>
    %cst_10 = arith.constant dense<0.000000e+00> : vector<1x256xf32>
    %37 = vector.multi_reduction <add>, %36, %cst_10 [1] : vector<1x4x256xf32> to vector<1x256xf32>
    %38 = vector.shape_cast %37 : vector<1x256xf32> to vector<1x1x256xf32>
    %39 = arith.subf %30, %38 : vector<1x1x256xf32>
    %cst_11 = arith.constant -1.000000e+30 : f32
    %40 = vector.broadcast %cst_11 : f32 to vector<1x1x256xf32>
    %41 = arith.select %10, %39, %40 : vector<1x1x256xi1>, vector<1x1x256xf32>
    %c0_12 = arith.constant 0 : index
    %c0_13 = arith.constant 0 : index
    %c0_14 = arith.constant 0 : index
    %42 = vector.load %arg4[%c0_12, %c0_13, %c0_14] : memref<1x1x256xf32, #tpu.memory_space<vmem>>, vector<1x1x256xf32>
    tpu.vector_store %arg4[%c0_12, %c0_13, %c0_14], %41 {strides = array<i32>} : memref<1x1x256xf32, #tpu.memory_space<vmem>>, vector<1x1x256xf32>,
    %43 = arith.mulf %28, %12 : vector<1x1x256xf32>
    %44 = vector.broadcast %43 : vector<1x1x256xf32> to vector<1x4x256xf32>
    %45 = arith.mulf %21, %44 : vector<1x4x256xf32>
    %c0_15 = arith.constant 0 : index
    %c0_16 = arith.constant 0 : index
    %c0_17 = arith.constant 0 : index
    %46 = vector.load %arg5[%c0_15, %c0_16, %c0_17] : memref<1x4x1xf32, #tpu.memory_space<vmem>>, vector<1x4x1xf32>
    %47 = arith.mulf %45, %35 : vector<1x4x256xf32>
    %cst_18 = arith.constant dense<0.000000e+00> : vector<1x4xf32>
    %48 = vector.multi_reduction <add>, %47, %cst_18 [2] : vector<1x4x256xf32> to vector<1x4xf32>
    %49 = vector.shape_cast %48 : vector<1x4xf32> to vector<1x4x1xf32>
    %50 = arith.addf %46, %49 : vector<1x4x1xf32>
    %c0_19 = arith.constant 0 : index
    %c0_20 = arith.constant 0 : index
    %c0_21 = arith.constant 0 : index
    %51 = vector.load %arg5[%c0_19, %c0_20, %c0_21] : memref<1x4x1xf32, #tpu.memory_space<vmem>>, vector<1x4x1xf32>
    tpu.vector_store %arg5[%c0_19, %c0_20, %c0_21], %50 {strides = array<i32>} : memref<1x4x1xf32, #tpu.memory_space<vmem>>, vector<1x4x1xf32>,
    %c0_22 = arith.constant 0 : index
    %c0_23 = arith.constant 0 : index
    %c0_24 = arith.constant 0 : index
    %52 = vector.load %arg6[%c0_22, %c0_23, %c0_24] : memref<1x4x1xf32, #tpu.memory_space<vmem>>, vector<1x4x1xf32>
    %cst_25 = arith.constant dense<0.000000e+00> : vector<1x4xf32>
    %53 = vector.multi_reduction <add>, %45, %cst_25 [2] : vector<1x4x256xf32> to vector<1x4xf32>
    %54 = vector.shape_cast %53 : vector<1x4xf32> to vector<1x4x1xf32>
    %55 = arith.addf %52, %54 : vector<1x4x1xf32>
    %c0_26 = arith.constant 0 : index
    %c0_27 = arith.constant 0 : index
    %c0_28 = arith.constant 0 : index
    %56 = vector.load %arg6[%c0_26, %c0_27, %c0_28] : memref<1x4x1xf32, #tpu.memory_space<vmem>>, vector<1x4x1xf32>
    tpu.vector_store %arg6[%c0_26, %c0_27, %c0_28], %55 {strides = array<i32>} : memref<1x4x1xf32, #tpu.memory_space<vmem>>, vector<1x4x1xf32>,
    %c0_29 = arith.constant 0 : index
    %c0_30 = arith.constant 0 : index
    %c0_31 = arith.constant 0 : index
    %57 = vector.load %arg7[%c0_29, %c0_30, %c0_31] : memref<1x4x1xf32, #tpu.memory_space<vmem>>, vector<1x4x1xf32>
    %58 = vector.broadcast %12 : vector<1x1x256xf32> to vector<1x4x256xf32>
    %59 = arith.mulf %35, %58 : vector<1x4x256xf32>
    %cst_32 = arith.constant dense<0.000000e+00> : vector<1x4xf32>
    %60 = vector.multi_reduction <add>, %59, %cst_32 [2] : vector<1x4x256xf32> to vector<1x4xf32>
    %61 = vector.shape_cast %60 : vector<1x4xf32> to vector<1x4x1xf32>
    %62 = arith.addf %57, %61 : vector<1x4x1xf32>
    %c0_33 = arith.constant 0 : index
    %c0_34 = arith.constant 0 : index
    %c0_35 = arith.constant 0 : index
    %63 = vector.load %arg7[%c0_33, %c0_34, %c0_35] : memref<1x4x1xf32, #tpu.memory_space<vmem>>, vector<1x4x1xf32>
    tpu.vector_store %arg7[%c0_33, %c0_34, %c0_35], %62 {strides = array<i32>} : memref<1x4x1xf32, #tpu.memory_space<vmem>>, vector<1x4x1xf32>,
    return
  }
  func.func @transform_0(%arg0: i32, %arg1: i32) -> (i32, i32, i32) {
    %c0_i32 = arith.constant 0 : i32
    %c0_i32_0 = arith.constant 0 : i32
    return %arg0, %c0_i32, %arg1 : i32, i32, i32
  }
  func.func @transform_1(%arg0: i32, %arg1: i32) -> (i32, i32, i32) {
    %c0_i32 = arith.constant 0 : i32
    %c0_i32_0 = arith.constant 0 : i32
    return %arg0, %c0_i32, %arg1 : i32, i32, i32
  }
  func.func @transform_2(%arg0: i32, %arg1: i32) -> (i32, i32, i32) {
    %c0_i32 = arith.constant 0 : i32
    %c0_i32_0 = arith.constant 0 : i32
    return %arg0, %c0_i32, %arg1 : i32, i32, i32
  }
  func.func @transform_3(%arg0: i32, %arg1: i32) -> (i32, i32, i32) {
    %c0_i32 = arith.constant 0 : i32
    %c0_i32_0 = arith.constant 0 : i32
    %c0_i32_1 = arith.constant 0 : i32
    return %arg0, %c0_i32, %c0_i32_0 : i32, i32, i32
  }
  func.func @transform_4(%arg0: i32, %arg1: i32) -> (i32, i32, i32) {
    %c0_i32 = arith.constant 0 : i32
    %c0_i32_0 = arith.constant 0 : i32
    %c0_i32_1 = arith.constant 0 : i32
    return %arg0, %c0_i32, %c0_i32_0 : i32, i32, i32
  }
  func.func @transform_5(%arg0: i32, %arg1: i32) -> (i32, i32, i32) {
    %c0_i32 = arith.constant 0 : i32
    %c0_i32_0 = arith.constant 0 : i32
    %c0_i32_1 = arith.constant 0 : i32
    return %arg0, %c0_i32, %c0_i32_0 : i32, i32, i32
  }
}

</mosaic_0001>

<llo_original>
// kernel: tpu_custom_call.1
$region0: #{tpu_custom_call.1}
  #allocation0 [shape = 'u32[]', space=smem, size = 0x4, offset = 0x4, fixed_abs, tag = 'smem constant byte address 0x4 - core index']
  #allocation1 [shape = 'u32[144,128]{1,0:T(1,128)}', space=vmem, size = 0x12000, scoped, tag = 'internal scratch']
  %s0 = inlined_call_operand.hbm [shape: f32[2,4,256], index: 0, kind: input, shape index: {}]
  %s1 = inlined_call_operand.hbm [shape: s32[2,1,256], index: 1, kind: input, shape index: {}]
  %s2 = inlined_call_operand.hbm [shape: f32[2,1,256], index: 2, kind: output, shape index: {0}]
  %s3 = inlined_call_operand.vmem [shape: f32[2,4,1], index: 3, kind: output, shape index: {1}]
  %s4 = inlined_call_operand.vmem [shape: f32[2,4,1], index: 4, kind: output, shape index: {2}]
  %s5 = inlined_call_operand.vmem [shape: f32[2,4,1], index: 5, kind: output, shape index: {3}]
  %6 = xla_tuple %s2, %s3, %s4, %s5
  %s7 = sld [smem:[#allocation0]]
  $region77: #{tpu_custom_call.1} parent=0
    _
  %s9 = ssub.s32 1, %s7
  %s10 = scalar_select 0, %s9, %s7
  $region1: #{tpu_custom_call.1} parent=0
    #allocation2 [shape = 'u8[8192]{0}', space=vmem, size = 0x2000, scoped, tag = 'input window, operand 0']
    #allocation3 [shape = 's32[2]{0}', space=sflag, size = 0x8, scoped, tag = 'scoped memory for tpu_custom_call.1']
    #allocation4 [shape = 's32[2]{0}', space=sflag, size = 0x8, scoped, tag = 'scoped memory for tpu_custom_call.1']
    #allocation5 [shape = 'u8[2048]{0}', space=vmem, size = 0x800, scoped, tag = 'input window, operand 1']
    #allocation6 [shape = 's32[2]{0}', space=sflag, size = 0x8, scoped, tag = 'scoped memory for tpu_custom_call.1']
    #allocation7 [shape = 'u8[2048]{0}', space=vmem, size = 0x800, scoped, tag = 'output window, operand 0']
    %11 = vsyncpa [#allocation3], 0
    %s12 = scalar_lea.sflag [#allocation3], 1
    %13 = vsyncpa %s12, 0
    %14 = vsyncpa [#allocation6], 0
    %s15 = scalar_lea.sflag [#allocation6], 1
    %16 = vsyncpa %s15, 0
    %17 = vsyncpa [#allocation4], 0
    %s18 = scalar_lea.sflag [#allocation4], 1
    %19 = vsyncpa %s18, 0
    loop: start=0, step=1, limit=4
    $region2: #{tpu_custom_call.1} parent=1 // loop_pre_header
      _
    $region3: #{tpu_custom_call.1} parent=1 // loop_header
      %s21 = sphi 0, %s25
      %p22 = scmp.ge.s32.totalorder %s21, 4
      %s28 = sphi 0, %s40
      %s29 = sphi 0, %s36
      %s30 = sphi 0, %s28
      %s31 = sphi 0, %s29
      %s32 = sphi 0, %s30
      %s33 = sphi 0, %s31
      %s45 = sphi 0, %s47
      %s48 = sphi 0, %s45
      %s49 = sphi 0, %s48
      %s65 = sphi 0, %s49
      %s73 = sphi 0, %s75
      %s76 = sphi 0, %s73
      %s77 = sphi 0, %s76
      %s93 = sphi 0, %s77
      %s101 = sphi 0, %s103
      %s104 = sphi 0, %s101
      %s105 = sphi 0, %s104
      %s121 = sphi 0, %s105
      %s127 = sphi 0, %s129
      %s130 = sphi 0, %s127
      %s131 = sphi 0, %s130
      %s147 = sphi 0, %s131
      %s153 = sphi 0, %s155
      %s156 = sphi 0, %s153
      %s157 = sphi 0, %s156
      %s173 = sphi 0, %s157
      %s179 = sphi 0, %s181
      %s182 = sphi 0, %s179
      %s183 = sphi 0, %s182
      %s199 = sphi 0, %s183
    $region4: #{tpu_custom_call.1} parent=1 // loop_header_branch
      %24 = sbr.rel (%p22) target = $region8
    $region5: #{tpu_custom_call.1} parent=1 // loop_body
      %s26 = ssub.s32 %s21, 1
      %s27 = ssub.s32 %s21, 2
      %s34 = sadd.s32 1, %s29
      %p35 = scmp.ge.s32.totalorder %s34, 1
      %s36 = scalar_select %p35, 0, %s34
      %s37 = sadd.s32 1, %s28
      %s38 = scalar_select %p35, %s37, %s28
      %p39 = scmp.ge.s32.totalorder %s38, 2
      %s40 = scalar_select %p39, 0, %s38
      %s41 = ssub.s32 %s28, %s40
      %s42 = ssub.s32 %s29, %s36
      %s43 = sor.u32 %s41, %s42
      %p44 = scmp.eq.s32.totalorder %s43, 0
      %s46 = sadd.s32 %s45, 1
      %s47 = scalar_select %p44, %s45, %s46
      %p50 = pneg %p44
      %p51 = scmp.eq.s32.totalorder %s21, 1
      %p52 = por %p50, %p51
      %p53 = scmp.ne.s32.totalorder %s45, %s48
      %p54 = scmp.eq.s32.totalorder %s21, 0
      %p55 = por %p53, %p54
      %p56 = scmp.ne.s32.totalorder %s45, %s48
      %p57 = scmp.eq.s32.totalorder %s26, 1
      %p58 = por %p56, %p57
      %p59 = scmp.ne.s32.totalorder %s48, %s49
      %p60 = scmp.eq.s32.totalorder %s26, 0
      %p61 = por %p59, %p60
      %p62 = scmp.ne.s32.totalorder %s48, %s49
      %p63 = scmp.eq.s32.totalorder %s27, 1
      %p64 = por %p62, %p63
      %p66 = scmp.ne.s32.totalorder %s49, %s65
      %p67 = scmp.eq.s32.totalorder %s27, 0
      %p68 = por %p66, %p67
      %s69 = ssub.s32 %s28, %s40
      %s70 = ssub.s32 %s29, %s36
      %s71 = sor.u32 %s69, %s70
      %p72 = scmp.eq.s32.totalorder %s71, 0
      %s74 = sadd.s32 %s73, 1
      %s75 = scalar_select %p72, %s73, %s74
      %p78 = pneg %p72
      %p79 = scmp.eq.s32.totalorder %s21, 1
      %p80 = por %p78, %p79
      %p81 = scmp.ne.s32.totalorder %s73, %s76
      %p82 = scmp.eq.s32.totalorder %s21, 0
      %p83 = por %p81, %p82
      %p84 = scmp.ne.s32.totalorder %s73, %s76
      %p85 = scmp.eq.s32.totalorder %s26, 1
      %p86 = por %p84, %p85
      %p87 = scmp.ne.s32.totalorder %s76, %s77
      %p88 = scmp.eq.s32.totalorder %s26, 0
      %p89 = por %p87, %p88
      %p90 = scmp.ne.s32.totalorder %s76, %s77
      %p91 = scmp.eq.s32.totalorder %s27, 1
      %p92 = por %p90, %p91
      %p94 = scmp.ne.s32.totalorder %s77, %s93
      %p95 = scmp.eq.s32.totalorder %s27, 0
      %p96 = por %p94, %p95
      %s97 = ssub.s32 %s28, %s40
      %s98 = ssub.s32 %s29, %s36
      %s99 = sor.u32 %s97, %s98
      %p100 = scmp.eq.s32.totalorder %s99, 0
      %s102 = sadd.s32 %s101, 1
      %s103 = scalar_select %p100, %s101, %s102
      %p106 = pneg %p100
      %p107 = scmp.eq.s32.totalorder %s21, 1
      %p108 = por %p106, %p107
      %p109 = scmp.ne.s32.totalorder %s101, %s104
      %p110 = scmp.eq.s32.totalorder %s21, 0
      %p111 = por %p109, %p110
      %p112 = scmp.ne.s32.totalorder %s101, %s104
      %p113 = scmp.eq.s32.totalorder %s26, 1
      %p114 = por %p112, %p113
      %p115 = scmp.ne.s32.totalorder %s104, %s105
      %p116 = scmp.eq.s32.totalorder %s26, 0
      %p117 = por %p115, %p116
      %p118 = scmp.ne.s32.totalorder %s104, %s105
      %p119 = scmp.eq.s32.totalorder %s27, 1
      %p120 = por %p118, %p119
      %p122 = scmp.ne.s32.totalorder %s105, %s121
      %p123 = scmp.eq.s32.totalorder %s27, 0
      %p124 = por %p122, %p123
      %s125 = ssub.s32 %s28, %s40
      %p126 = scmp.eq.s32.totalorder %s125, 0
      %s128 = sadd.s32 %s127, 1
      %s129 = scalar_select %p126, %s127, %s128
      %p132 = pneg %p126
      %p133 = scmp.eq.s32.totalorder %s21, 1
      %p134 = por %p132, %p133
      %p135 = scmp.ne.s32.totalorder %s127, %s130
      %p136 = scmp.eq.s32.totalorder %s21, 0
      %p137 = por %p135, %p136
      %p138 = scmp.ne.s32.totalorder %s127, %s130
      %p139 = scmp.eq.s32.totalorder %s26, 1
      %p140 = por %p138, %p139
      %p141 = scmp.ne.s32.totalorder %s130, %s131
      %p142 = scmp.eq.s32.totalorder %s26, 0
      %p143 = por %p141, %p142
      %p144 = scmp.ne.s32.totalorder %s130, %s131
      %p145 = scmp.eq.s32.totalorder %s27, 1
      %p146 = por %p144, %p145
      %p148 = scmp.ne.s32.totalorder %s131, %s147
      %p149 = scmp.eq.s32.totalorder %s27, 0
      %p150 = por %p148, %p149
      %s151 = ssub.s32 %s28, %s40
      %p152 = scmp.eq.s32.totalorder %s151, 0
      %s154 = sadd.s32 %s153, 1
      %s155 = scalar_select %p152, %s153, %s154
      %p158 = pneg %p152
      %p159 = scmp.eq.s32.totalorder %s21, 1
      %p160 = por %p158, %p159
      %p161 = scmp.ne.s32.totalorder %s153, %s156
      %p162 = scmp.eq.s32.totalorder %s21, 0
      %p163 = por %p161, %p162
      %p164 = scmp.ne.s32.totalorder %s153, %s156
      %p165 = scmp.eq.s32.totalorder %s26, 1
      %p166 = por %p164, %p165
      %p167 = scmp.ne.s32.totalorder %s156, %s157
      %p168 = scmp.eq.s32.totalorder %s26, 0
      %p169 = por %p167, %p168
      %p170 = scmp.ne.s32.totalorder %s156, %s157
      %p171 = scmp.eq.s32.totalorder %s27, 1
      %p172 = por %p170, %p171
      %p174 = scmp.ne.s32.totalorder %s157, %s173
      %p175 = scmp.eq.s32.totalorder %s27, 0
      %p176 = por %p174, %p175
      %s177 = ssub.s32 %s28, %s40
      %p178 = scmp.eq.s32.totalorder %s177, 0
      %s180 = sadd.s32 %s179, 1
      %s181 = scalar_select %p178, %s179, %s180
      %p184 = pneg %p178
      %p185 = scmp.eq.s32.totalorder %s21, 1
      %p186 = por %p184, %p185
      %p187 = scmp.ne.s32.totalorder %s179, %s182
      %p188 = scmp.eq.s32.totalorder %s21, 0
      %p189 = por %p187, %p188
      %p190 = scmp.ne.s32.totalorder %s179, %s182
      %p191 = scmp.eq.s32.totalorder %s26, 1
      %p192 = por %p190, %p191
      %p193 = scmp.ne.s32.totalorder %s182, %s183
      %p194 = scmp.eq.s32.totalorder %s26, 0
      %p195 = por %p193, %p194
      %p196 = scmp.ne.s32.totalorder %s182, %s183
      %p197 = scmp.eq.s32.totalorder %s27, 1
      %p198 = por %p196, %p197
      %p200 = scmp.ne.s32.totalorder %s183, %s199
      %p201 = scmp.eq.s32.totalorder %s27, 0
      %p202 = por %p200, %p201
      %p203 = scmp.le.s32.totalorder 1, %s21
      %p204 = scmp.lt.s32.totalorder %s21, 3
      %p205 = pnand %p203, %p204
      %p206 = pneg %p205
      // Predicated region
      $region9: #{tpu_custom_call.1} parent=5 // pred_check
        _
      $region10: #{tpu_custom_call.1} parent=5 // pred_check_branch
        %208 = sbr.rel (%p205) target = $region12
      $region11: #{tpu_custom_call.1} parent=5 // pred_region
        %s209 = ssub.s32 %s21, 1
      $region12: #{tpu_custom_call.1} parent=5 // pred_fallthru
        _
      %p210 = scmp.lt.s32.totalorder %s21, 2
      // Predicated region
      $region13: #{tpu_custom_call.1} parent=5 // pred_check
        %p211 = pneg %p210
      $region14: #{tpu_custom_call.1} parent=5 // pred_check_branch
        %213 = sbr.rel (%p211) target = $region16
      $region15: #{tpu_custom_call.1} parent=5 // pred_region
        // Predicated region
        $region17: #{tpu_custom_call.1} parent=15 // pred_check
          %p214 = pneg %p55
        $region18: #{tpu_custom_call.1} parent=15 // pred_check_branch
          %216 = sbr.rel (%p214) target = $region20
        $region19: #{tpu_custom_call.1} parent=15 // pred_region
          %s217 = sand.u32 %s45, 1
          %s218 = scalar_lea.sflag [#allocation3], %s217
          %s219 = sand.u32 %s45, 1
          %s220 = smul.addr %s219, 8
          %s221 = scalar_lea.vmem [#allocation2], %s220
          %s222 = smul.u32 2, %s29
          %s224 = ssub.s32 128, 128
          %225 = vsyncadd %s218, %s224
          %s226 = smul.addr %s28, 2
          %s227 = sadd.s32 %s222, %s226
          %s228 = smul.addr %s227, 64
          %s229 = scalar_lea.hbm %s0, %s228
          %s231 = sshll.u32 %s221, 4
          %s232 = int_to_ptr.vmem [resolvable:$true] %s231
          %234 = dma.hbm_to_vmem [thread:$0]  %s229, 128, %s232, %s218
        $region20: #{tpu_custom_call.1} parent=15 // pred_fallthru
          _
        // Predicated region
        $region21: #{tpu_custom_call.1} parent=15 // pred_check
          %p235 = pneg %p83
        $region22: #{tpu_custom_call.1} parent=15 // pred_check_branch
          %237 = sbr.rel (%p235) target = $region24
        $region23: #{tpu_custom_call.1} parent=15 // pred_region
          %s238 = sand.u32 %s73, 1
          %s239 = scalar_lea.sflag [#allocation6], %s238
          %s240 = sand.u32 %s73, 1
          %s241 = smul.addr %s240, 2
          %s242 = scalar_lea.vmem [#allocation5], %s241
          %s243 = smul.u32 2, %s29
          %s245 = ssub.s32 32, 32
          %246 = vsyncadd %s239, %s245
          %s247 = smul.addr %s28, 2
          %s248 = sadd.s32 %s243, %s247
          %s249 = smul.addr %s248, 16
          %s250 = scalar_lea.hbm %s1, %s249
          %s252 = sshll.u32 %s242, 4
          %s253 = int_to_ptr.vmem [resolvable:$true] %s252
          %255 = dma.hbm_to_vmem [thread:$0]  %s250, 32, %s253, %s239
        $region24: #{tpu_custom_call.1} parent=15 // pred_fallthru
          _
      $region16: #{tpu_custom_call.1} parent=5 // pred_fallthru
        _
      %p256 = scmp.le.s32.totalorder 1, %s21
      %p257 = scmp.lt.s32.totalorder %s21, 3
      %p258 = pnand %p256, %p257
      %p259 = pneg %p258
      // Predicated region
      $region25: #{tpu_custom_call.1} parent=5 // pred_check
        _
      $region26: #{tpu_custom_call.1} parent=5 // pred_check_branch
        %261 = sbr.rel (%p258) target = $region28
      $region27: #{tpu_custom_call.1} parent=5 // pred_region
        %s262 = ssub.s32 %s21, 1
        %s263 = sand.u32 %s48, 1
        %s264 = scalar_lea.sflag [#allocation3], %s263
        %s265 = sand.u32 %s48, 1
        %s266 = smul.addr %s265, 8
        %s267 = scalar_lea.vmem [#allocation2], %s266
        // Predicated region
        $region29: #{tpu_custom_call.1} parent=27 // pred_check
          %p268 = pneg %p61
        $region30: #{tpu_custom_call.1} parent=27 // pred_check_branch
          %270 = sbr.rel (%p268) target = $region32
        $region31: #{tpu_custom_call.1} parent=27 // pred_region
          %271 = dma.done %s264, 128
        $region32: #{tpu_custom_call.1} parent=27 // pred_fallthru
          _
        %s272 = sand.u32 %s76, 1
        %s273 = scalar_lea.sflag [#allocation6], %s272
        %s274 = sand.u32 %s76, 1
        %s275 = smul.addr %s274, 2
        %s276 = scalar_lea.vmem [#allocation5], %s275
        // Predicated region
        $region33: #{tpu_custom_call.1} parent=27 // pred_check
          %p277 = pneg %p89
        $region34: #{tpu_custom_call.1} parent=27 // pred_check_branch
          %279 = sbr.rel (%p277) target = $region36
        $region35: #{tpu_custom_call.1} parent=27 // pred_region
          %280 = dma.done %s273, 32
        $region36: #{tpu_custom_call.1} parent=27 // pred_fallthru
          _
        %s281 = sand.u32 %s48, 1
        %s282 = scalar_lea.sflag [#allocation3], %s281
        %s283 = sand.u32 %s48, 1
        %s284 = smul.addr %s283, 8
        %s285 = scalar_lea.vmem [#allocation2], %s284
        %p286 = pneg %p61
        %p287 = pneg %p58
        %s288 = sand.u32 %s76, 1
        %s289 = scalar_lea.sflag [#allocation6], %s288
        %s290 = sand.u32 %s76, 1
        %s291 = smul.addr %s290, 2
        %s292 = scalar_lea.vmem [#allocation5], %s291
        %p293 = pneg %p89
        %p294 = pneg %p86
        %p295 = pneg %p117
        %p296 = pneg %p114
        %s297 = sand.u32 %s104, 1
        %s298 = scalar_lea.sflag [#allocation4], %s297
        %s299 = sand.u32 %s104, 1
        %s300 = smul.addr %s299, 2
        %s301 = scalar_lea.vmem [#allocation7], %s300
        %p302 = pneg %p143
        %p303 = pneg %p140
        %p304 = scmp.lt.s32.totalorder %s30, 1
        %s305 = scalar_select %p304, %s30, 1
        %s306 = smul.addr %s305, 4
        %s307 = scalar_lea.vmem %s3, %s306
        %p308 = pneg %p169
        %p309 = pneg %p166
        %p310 = scmp.lt.s32.totalorder %s30, 1
        %s311 = scalar_select %p310, %s30, 1
        %s312 = smul.addr %s311, 4
        %s313 = scalar_lea.vmem %s4, %s312
        %p314 = pneg %p195
        %p315 = pneg %p192
        %p316 = scmp.lt.s32.totalorder %s30, 1
        %s317 = scalar_select %p316, %s30, 1
        %s318 = smul.addr %s317, 4
        %s319 = scalar_lea.vmem %s5, %s318
        %s320 = smul.u32 2, %s31
        %s321 = smul.u32 2, %s31
        %s322 = smul.u32 2, %s31
        %p323 = scmp.lt.s32.totalorder %s30, 1
        %s324 = scalar_select %p323, %s30, 1
        %s325 = smul.addr %s324, 4
        %s326 = scalar_lea.vmem %s3, %s325
        %p327 = scmp.lt.s32.totalorder %s30, 1
        %s328 = scalar_select %p327, %s30, 1
        %s329 = smul.addr %s328, 4
        %s330 = scalar_lea.vmem %s4, %s329
        %p331 = scmp.lt.s32.totalorder %s30, 1
        %s332 = scalar_select %p331, %s30, 1
        %s333 = smul.addr %s332, 4
        %s334 = scalar_lea.vmem %s5, %s333
        %p335 = scmp.eq.s32.totalorder %s31, 0
        // Predicated region
        $region37: #{tpu_custom_call.1} parent=27 // pred_check
          %p336 = pneg %p335
        $region38: #{tpu_custom_call.1} parent=27 // pred_check_branch
          %338 = sbr.rel (%p336) target = $region40
        $region39: #{tpu_custom_call.1} parent=27 // pred_region
          %vm339 = vcmask 3072
          %340 = vst.msk [vmem:[%s326] sm:$0xf] %vm339, 0.0
          %341 = vst.msk [vmem:[%s330] sm:$0xf] %vm339, 0.0
          %342 = vst.msk [vmem:[%s334] sm:$0xf] %vm339, 0.0
        $region40: #{tpu_custom_call.1} parent=27 // pred_fallthru
          _
        %v343 = vld [vmem:[%s267] sm:$0xff]
        %v344 = vld [vmem:[%s276] sm:$0x3]
        %v345 = vlaneseq
        %v346 = vand.u32 %v345, 127
        %v347 = vadd.s32 %v346, 128
        %s348 = smul.u32 %s31, 256
        %v349 = vstv %s348
        %v350 = vadd.s32 %v349, %v346
        %v351 = vadd.s32 %v349, %v347
        %vm352 = vcmp.lt.s32.totalorder %v350, 256
        %vm353 = vcmp.lt.s32.totalorder %v351, 256
        %v354 = vsel %vm352, 1, 0
        %v355 = vsel %vm353, 1, 0
        %v356 = vcvt.s32.f32 %v354
        %v357 = vcvt.s32.f32 %v355
        %vm358 = vcmp.eq.s32.totalorder %v354, 1
        %vm359 = vcmp.eq.s32.totalorder %v355, 1
        %v361 = vcombine.high %v343, %v343
        %v363 = vsel %vm358, %v343, 0.0
        %v364 = vsel %vm359, %v361, 0.0
        %vm365 = vcmask 1043456
        %v366 = vsel %vm365, %v363, -inf
        %v367 = vrot.slane %v366, 4
        %v368 = vmax.f32 %v366, %v367
        %v369 = vrot.slane %v368, 2
        %v370 = vmax.f32 %v368, %v369
        %v371 = vrot.slane %v370, 1
        %v372 = vmax.f32 %v370, %v371
        %v373 = vsel %vm365, %v364, -inf
        %v374 = vrot.slane %v373, 4
        %v375 = vmax.f32 %v373, %v374
        %v376 = vrot.slane %v375, 2
        %v377 = vmax.f32 %v375, %v376
        %v378 = vrot.slane %v377, 1
        %v379 = vmax.f32 %v377, %v378
        %v380 = vsub.f32 %v363, %v372
        %v381 = vsub.f32 %v364, %v379
        %v382 = vmul.f32 %v380, 1.442695
        %v383 = vpow.pop %v382
        %v384 = vmul.f32 %v381, 1.442695
        %v385 = vpow.pop %v384
        %v386 = vsel %vm365, %v383, 0.0
        %v387 = vrot.slane %v386, 4
        %v388 = vadd.f32 %v386, %v387
        %v389 = vrot.slane %v388, 2
        %v390 = vadd.f32 %v388, %v389
        %v391 = vrot.slane %v390, 1
        %v392 = vadd.f32 %v390, %v391
        %v393 = vsel %vm365, %v385, 0.0
        %v394 = vrot.slane %v393, 4
        %v395 = vadd.f32 %v393, %v394
        %v396 = vrot.slane %v395, 2
        %v397 = vadd.f32 %v395, %v396
        %v398 = vrot.slane %v397, 1
        %v399 = vadd.f32 %v397, %v398
        %v400 = vrcp.pop %v392
        %v401 = vrcp.pop %v399
        %v402 = vmul.f32 %v392, %v400
        %v403 = vmul.f32 %v399, %v401
        %v404 = vsub.f32 2.0, %v402
        %v405 = vsub.f32 2.0, %v403
        %v406 = vmul.f32 %v400, %v404
        %v407 = vmul.f32 %v401, %v405
        %v408 = vlog2.pop %v392
        %v409 = vmul.f32 %v408, 0.6931472
        %v410 = vlog2.pop %v399
        %v411 = vmul.f32 %v410, 0.6931472
        %v412 = vadd.f32 %v372, %v409
        %v413 = vadd.f32 %v379, %v411
        %v414 = vlaneseq
        %v415 = vshrl.u32 %v414, 7
        %v416 = vlaneseq
        %v417 = vshrl.u32 %v416, 7
        %v418 = vsub.s32 0, %v417
        %v419 = vrot.slane %v344, %v418
        %v420 = vlaneseq
        %v421 = vshrl.u32 %v420, 7
        %v422 = vsub.s32 1, %v421
        %v423 = vrot.slane %v344, %v422
        %vm424 = vcmp.eq.s32.totalorder %v415, %v419
        %vm425 = vcmp.eq.s32.totalorder %v415, %v423
        %v426 = vsel %vm424, 1, 0
        %v427 = vsel %vm425, 1, 0
        %v428 = vcvt.s32.f32 %v426
        %v429 = vcvt.s32.f32 %v427
        %v430 = vmul.f32 %v363, %v428
        %v431 = vmul.f32 %v364, %v429
        %v432 = vsel %vm365, %v430, 0.0
        %v433 = vrot.slane %v432, 4
        %v434 = vadd.f32 %v432, %v433
        %v435 = vrot.slane %v434, 2
        %v436 = vadd.f32 %v434, %v435
        %v437 = vrot.slane %v436, 1
        %v438 = vadd.f32 %v436, %v437
        %v439 = vsel %vm365, %v431, 0.0
        %v440 = vrot.slane %v439, 4
        %v441 = vadd.f32 %v439, %v440
        %v442 = vrot.slane %v441, 2
        %v443 = vadd.f32 %v441, %v442
        %v444 = vrot.slane %v443, 1
        %v445 = vadd.f32 %v443, %v444
        %v446 = vsub.f32 %v412, %v438
        %v447 = vsub.f32 %v413, %v445
        %v448 = vsel %vm352, %v446, -1e+30
        %v449 = vsel %vm353, %v447, -1e+30
        %v452 = vcombine.low %v448, %v449
        %v454 = vunpack.c.l.s4 1966171168
        %v455 = vunpack.c.0.s8 %v454
        %v456 = vlaneseq
        %v457 = vshrl.u32 %v456, 7
        %v458 = vsub.s32 %v455, %v457
        %v459 = vrot.slane %v452, %v458
        %v461 = vunpack.c.l.s4 1966171168
        %v462 = vunpack.c.0.s8 %v461
        %v463 = vlaneseq
        %v464 = vshrl.u32 %v463, 7
        %v465 = vsub.s32 %v462, %v464
        %v466 = vrot.slane %v459, %v465
        %v468 = vlaneseq
        %vm469 = vcmp.ge.s32.totalorder %v468, 0
        %vm470 = vcmp.lt.s32.totalorder %v468, 256
        %vm471 = vmand %vm469, %vm470
        %472 = vst.msk [vmem:[%s301] sm:$0x3] %vm471, %v466
        %v473 = vmul.f32 %v406, %v356
        %v474 = vmul.f32 %v407, %v357
        %v475 = vmul.f32 %v383, %v473
        %v476 = vmul.f32 %v385, %v474
        %v477 = vld [vmem:[%s326] sm:$0xf]
        %v478 = vmul.f32 %v475, %v428
        %v479 = vmul.f32 %v476, %v429
        %v480 = vsel %vm365, %v478, 0.0
        %v481 = vsel %vm365, %v479, 0.0
        %v482 = vadd.f32 %v480, %v481
        %483 = vadd.xlane.f32.xlu0 %v482
        %v484 = vpop.xlane.xlu0 %483
        %v485 = vadd.f32 %v477, %v484
        %vm486 = vcmask 3072
        %487 = vst.msk [vmem:[%s326] sm:$0xf] %vm486, %v485
        %v488 = vld [vmem:[%s330] sm:$0xf]
        %v489 = vsel %vm365, %v475, 0.0
        %v490 = vsel %vm365, %v476, 0.0
        %v491 = vadd.f32 %v489, %v490
        %492 = vadd.xlane.f32.xlu0 %v491
        %v493 = vpop.xlane.xlu0 %492
        %v494 = vadd.f32 %v488, %v493
        %495 = vst.msk [vmem:[%s330] sm:$0xf] %vm486, %v494
        %v496 = vld [vmem:[%s334] sm:$0xf]
        %v497 = vmul.f32 %v428, %v356
        %v498 = vmul.f32 %v429, %v357
        %v499 = vsel %vm365, %v497, 0.0
        %v500 = vsel %vm365, %v498, 0.0
        %v501 = vadd.f32 %v499, %v500
        %502 = vadd.xlane.f32.xlu0 %v501
        %v503 = vpop.xlane.xlu0 %502
        %v504 = vadd.f32 %v496, %v503
        %505 = vst.msk [vmem:[%s334] sm:$0xf] %vm486, %v504
        %s506 = sand.u32 %s104, 1
        %s507 = scalar_lea.sflag [#allocation4], %s506
        %s508 = sand.u32 %s104, 1
        %s509 = smul.addr %s508, 2
        %s510 = scalar_lea.vmem [#allocation7], %s509
        %p511 = scmp.lt.s32.totalorder %s30, 1
        %s512 = scalar_select %p511, %s30, 1
        %s513 = smul.addr %s512, 4
        %s514 = scalar_lea.vmem %s3, %s513
        %p515 = scmp.lt.s32.totalorder %s30, 1
        %s516 = scalar_select %p515, %s30, 1
        %s517 = smul.addr %s516, 4
        %s518 = scalar_lea.vmem %s4, %s517
        %p519 = scmp.lt.s32.totalorder %s30, 1
        %s520 = scalar_select %p519, %s30, 1
        %s521 = smul.addr %s520, 4
        %s522 = scalar_lea.vmem %s5, %s521
        // Predicated region
        $region41: #{tpu_custom_call.1} parent=27 // pred_check
          %p523 = pneg %p114
        $region42: #{tpu_custom_call.1} parent=27 // pred_check_branch
          %525 = sbr.rel (%p523) target = $region44
        $region43: #{tpu_custom_call.1} parent=27 // pred_region
          %s526 = smul.u32 2, %s31
          %s528 = ssub.s32 32, 32
          %529 = vsyncadd %s507, %s528
          %s530 = smul.addr %s30, 2
          %s531 = sadd.s32 %s526, %s530
          %s532 = smul.addr %s531, 16
          %s533 = scalar_lea.hbm %s2, %s532
          %s535 = sshll.u32 %s510, 4
          %s536 = int_to_ptr.vmem [resolvable:$true] %s535
          %538 = dma.vmem_to_hbm [thread:$0]  %s536, 32, %s533, %s507
        $region44: #{tpu_custom_call.1} parent=27 // pred_fallthru
          _
        // Predicated region
        $region45: #{tpu_custom_call.1} parent=27 // pred_check
          %p539 = pneg %p140
        $region46: #{tpu_custom_call.1} parent=27 // pred_check_branch
          %541 = sbr.rel (%p539) target = $region48
        $region47: #{tpu_custom_call.1} parent=27 // pred_region
          _
        $region48: #{tpu_custom_call.1} parent=27 // pred_fallthru
          _
        // Predicated region
        $region49: #{tpu_custom_call.1} parent=27 // pred_check
          %p542 = pneg %p166
        $region50: #{tpu_custom_call.1} parent=27 // pred_check_branch
          %544 = sbr.rel (%p542) target = $region52
        $region51: #{tpu_custom_call.1} parent=27 // pred_region
          _
        $region52: #{tpu_custom_call.1} parent=27 // pred_fallthru
          _
        // Predicated region
        $region53: #{tpu_custom_call.1} parent=27 // pred_check
          %p545 = pneg %p192
        $region54: #{tpu_custom_call.1} parent=27 // pred_check_branch
          %547 = sbr.rel (%p545) target = $region56
        $region55: #{tpu_custom_call.1} parent=27 // pred_region
          _
        $region56: #{tpu_custom_call.1} parent=27 // pred_fallthru
          _
      $region28: #{tpu_custom_call.1} parent=5 // pred_fallthru
        _
      %p548 = scmp.le.s32.totalorder 2, %s21
      // Predicated region
      $region57: #{tpu_custom_call.1} parent=5 // pred_check
        %p549 = pneg %p548
      $region58: #{tpu_custom_call.1} parent=5 // pred_check_branch
        %551 = sbr.rel (%p549) target = $region60
      $region59: #{tpu_custom_call.1} parent=5 // pred_region
        %s552 = ssub.s32 %s21, 2
        // Predicated region
        $region61: #{tpu_custom_call.1} parent=59 // pred_check
          %p553 = pneg %p120
        $region62: #{tpu_custom_call.1} parent=59 // pred_check_branch
          %555 = sbr.rel (%p553) target = $region64
        $region63: #{tpu_custom_call.1} parent=59 // pred_region
          %s556 = sand.u32 %s105, 1
          %s557 = scalar_lea.sflag [#allocation4], %s556
          %s558 = sand.u32 %s105, 1
          %s559 = smul.addr %s558, 2
          %s560 = scalar_lea.vmem [#allocation7], %s559
          %561 = dma.done %s557, 32
        $region64: #{tpu_custom_call.1} parent=59 // pred_fallthru
          _
        // Predicated region
        $region65: #{tpu_custom_call.1} parent=59 // pred_check
          %p562 = pneg %p146
        $region66: #{tpu_custom_call.1} parent=59 // pred_check_branch
          %564 = sbr.rel (%p562) target = $region68
        $region67: #{tpu_custom_call.1} parent=59 // pred_region
          %p565 = scmp.lt.s32.totalorder %s32, 1
          %s566 = scalar_select %p565, %s32, 1
          %s567 = smul.addr %s566, 4
          %s568 = scalar_lea.vmem %s3, %s567
        $region68: #{tpu_custom_call.1} parent=59 // pred_fallthru
          _
        // Predicated region
        $region69: #{tpu_custom_call.1} parent=59 // pred_check
          %p569 = pneg %p172
        $region70: #{tpu_custom_call.1} parent=59 // pred_check_branch
          %571 = sbr.rel (%p569) target = $region72
        $region71: #{tpu_custom_call.1} parent=59 // pred_region
          %p572 = scmp.lt.s32.totalorder %s32, 1
          %s573 = scalar_select %p572, %s32, 1
          %s574 = smul.addr %s573, 4
          %s575 = scalar_lea.vmem %s4, %s574
        $region72: #{tpu_custom_call.1} parent=59 // pred_fallthru
          _
        // Predicated region
        $region73: #{tpu_custom_call.1} parent=59 // pred_check
          %p576 = pneg %p198
        $region74: #{tpu_custom_call.1} parent=59 // pred_check_branch
          %578 = sbr.rel (%p576) target = $region76
        $region75: #{tpu_custom_call.1} parent=59 // pred_region
          %p579 = scmp.lt.s32.totalorder %s32, 1
          %s580 = scalar_select %p579, %s32, 1
          %s581 = smul.addr %s580, 4
          %s582 = scalar_lea.vmem %s5, %s581
        $region76: #{tpu_custom_call.1} parent=59 // pred_fallthru
          _
      $region60: #{tpu_custom_call.1} parent=5 // pred_fallthru
        _
    $region6: #{tpu_custom_call.1} parent=1 // loop_footer
      %s25 = sadd.s32 1, %s21
    $region7: #{tpu_custom_call.1} parent=1 // loop_footer_branch
      %20 = sbr.rel target = $region3
    $region8: #{tpu_custom_call.1} parent=1 // loop_exit
      _
    %583 = vsyncpa [#allocation3], 1
    %s584 = scalar_lea.sflag [#allocation3], 1
    %585 = vsyncpa %s584, 1
    %586 = vsyncpa [#allocation6], 1
    %s587 = scalar_lea.sflag [#allocation6], 1
    %588 = vsyncpa %s587, 1
    %589 = vsyncpa [#allocation4], 1
    %s590 = scalar_lea.sflag [#allocation4], 1
    %591 = vsyncpa %s590, 1

</llo_original>
